<compile_context>
chip_gen: v6e
topology: v6e:2x2x1
jax: 0.10.0
libtpu: 0.0.40
codegen_flags: <defaults>
</compile_context>

<pallas_src>
import functools

import numpy as np
import jax
import jax.numpy as jnp
from jax.experimental import pallas as pl
from jax.experimental.pallas import tpu as pltpu


@functools.lru_cache(maxsize=None)
def _interp_matrix(z_dim: int, p_out: int) -> np.ndarray:
    """Weights replicating torch F.interpolate(mode='linear', align_corners=False)
    from length z_dim to length p_out, expressed as a (z_dim, p_out) matrix.
    Cached so the Python loop / host transfer happens once per shape."""
    W = np.zeros((z_dim, p_out), dtype=np.float32)
    scale = z_dim / p_out
    for p in range(p_out):
        src = scale * (p + 0.5) - 0.5
        src = max(src, 0.0)
        i0 = min(int(np.floor(src)), z_dim - 1)
        i1 = min(i0 + 1, z_dim - 1)
        w1 = src - i0
        W[i0, p] += 1.0 - w1
        W[i1, p] += w1
    return W


def _red_psm_kernel(psi_ref, spat_ref, mask_ref, f_ref):
    # MXU-natural contraction: (Pr, K1) @ (K1, TSS) -> (Pr, TSS),
    # bf16 operands, f32 accumulation.
    f = jnp.dot(psi_ref[...], spat_ref[...], preferred_element_type=jnp.float32)
    # Single mask application (binary FOV mask => identical to the module's
    # double application), done in f32 on the VPU.
    f_ref[...] = mask_ref[...] * f


def red_psm_forward(temporal_fcts, spatial_basis_fcts, mask, P, rep,
                    *, tss=2048, compute_dtype=jnp.bfloat16):
    """Pallas implementation of RedPsm.forward() (temporal_basis='linear',
    temporal_mode='z'). Returns (psi_mtx [K+1, P//rep], f_psm_est [S, S, P//rep])."""
    K1, z_dim = temporal_fcts.shape[1], temporal_fcts.shape[2]
    S = spatial_basis_fcts.shape[-1]
    assert P % rep == 0, "P must be divisible by rep"
    Pr = P // rep
    SS = S * S

    # --- psi = T @ W_interp (tiny; stays in XLA, returned in f32 as the module does)
    T = temporal_fcts[0].astype(jnp.float32)                       # (K+1, z_dim)
    W = jnp.asarray(_interp_matrix(z_dim, Pr))                     # (z_dim, Pr)
    psi = jnp.dot(T, W)                                            # (K+1, Pr), f32

    spat = spatial_basis_fcts.reshape(K1, SS)                      # (K+1, S*S)
    mask_flat = mask.reshape(1, SS).astype(jnp.float32)            # (1, S*S)

    if SS < 1024:
        # Tiny problems: pallas_call custom-call overhead + (8,128) lane padding
        # dominate; fused XLA is the right tool there.
        f = jnp.dot(psi.T, mask_flat * spat.astype(jnp.float32))
        f = mask_flat * f
        return psi, jnp.transpose(f.reshape(Pr, S, S), (1, 2, 0))

    psi_t = psi.T.astype(compute_dtype)                            # (Pr, K+1)
    spat_c = spat.astype(compute_dtype)                            # (K+1, S*S)

    tss = min(tss, SS)                                             # lane tile (mult. of 128)
    grid = (pl.cdiv(SS, tss),)

    f = pl.pallas_call(
        _red_psm_kernel,
        out_shape=jax.ShapeDtypeStruct((Pr, SS), jnp.float32),
        grid_spec=pltpu.PrefetchScalarGridSpec(
            num_scalar_prefetch=0,
            grid=grid,
            in_specs=[
                pl.BlockSpec((Pr, K1), lambda j: (0, 0)),          # grid-invariant
                pl.BlockSpec((K1, tss), lambda j: (0, j)),
                pl.BlockSpec((1, tss), lambda j: (0, j)),
            ],
            out_specs=pl.BlockSpec((Pr, tss), lambda j: (0, j)),
        ),
        compiler_params=pltpu.CompilerParams(
            dimension_semantics=("parallel",)),                    # megacore on v7x
    )(psi_t, spat_c, mask_flat)

    # glue: (Pr, S, S) -> (S, S, Pr), matching .permute(1, 2, 0)
    f_psm_est = jnp.transpose(f.reshape(Pr, S, S), (1, 2, 0))
    return psi, f_psm_est


if __name__ == "__main__":
    # Small-but-real problem so the tiled Pallas path is exercised:
    # spatial_dim=128 (SS=16384 -> 8 grid tiles of 2048 lanes), P=128 measurements,
    # rep=4 -> Pr=32, PSM order K=7 (K+1=8 basis fcts), z_dim=8.
    P, rep, K, z_dim, spatial_dim = 128, 4, 7, 8, 128
    K1, Pr = K + 1, P // rep

    key = jax.random.PRNGKey(0)
    k_t, k_s = jax.random.split(key)
    # Module init: temporal_fcts (1, K+1, z_dim) ~ randn; spatial_basis_fcts
    # (K+1, S, S). The module zero-inits the spatial basis ('random' path),
    # which would make the output trivially zero — use randn so the kernel is
    # exercised meaningfully.
    temporal_fcts = jax.random.normal(k_t, (1, K1, z_dim), dtype=jnp.float32)
    spatial_basis_fcts = jax.random.normal(
        k_s, (K1, spatial_dim, spatial_dim), dtype=jnp.float32)

    # Circular FOV mask (the mask=True branch of __init__).
    ii, jj = np.meshgrid(np.arange(spatial_dim), np.arange(spatial_dim),
                         indexing="ij")
    c = spatial_dim // 2
    mask_np = ((ii - c) ** 2 + (jj - c) ** 2 < c ** 2).astype(np.float32)
    mask = jnp.asarray(mask_np)

    psi, f_psm_est = red_psm_forward(temporal_fcts, spatial_basis_fcts, mask,
                                     P, rep)
    jax.block_until_ready((psi, f_psm_est))

    # --- references ---
    W = jnp.asarray(_interp_matrix(z_dim, Pr))
    psi_f32 = temporal_fcts[0] @ W                                 # (K+1, Pr)

    # (a) matched-precision reference (bf16 operands, f32 accumulation, single
    #     mask application) -> tight tolerance check of the kernel itself.
    spat2d = spatial_basis_fcts.reshape(K1, spatial_dim * spatial_dim)
    f_match = jnp.dot(psi_f32.T.astype(jnp.bfloat16),
                      spat2d.astype(jnp.bfloat16),
                      preferred_element_type=jnp.float32)
    f_match = mask.reshape(1, -1) * f_match
    f_match = jnp.transpose(
        f_match.reshape(Pr, spatial_dim, spatial_dim), (1, 2, 0))

    # (b) full-f32 reference of the original torch forward (mask applied twice,
    #     identical for a binary mask) -> looser tolerance (bf16 quantization).
    masked = mask[None, :, :] * spatial_basis_fcts
    f_ref = jnp.einsum('kp,kjs->pjs', psi_f32, masked)
    f_ref = jnp.transpose(mask[None, :, :] * f_ref, (1, 2, 0))

    assert psi.shape == (K1, Pr)
    assert f_psm_est.shape == (spatial_dim, spatial_dim, Pr)
    np.testing.assert_allclose(np.asarray(psi), np.asarray(psi_f32),
                               rtol=1e-5, atol=1e-5)
    np.testing.assert_allclose(np.asarray(f_psm_est), np.asarray(f_match),
                               rtol=1e-3, atol=1e-3)
    np.testing.assert_allclose(np.asarray(f_psm_est), np.asarray(f_ref),
                               rtol=5e-2, atol=2e-1)
    print("KERNEL_OK")
</pallas_src>

<mosaic_0001>
module attributes {stable_mosaic.version = 11 : i64} {
  func.func @_red_psm_kernel(%arg0: i32, %arg1: memref<32x8xbf16, #tpu.memory_space<vmem>>, %arg2: memref<8x2048xbf16, #tpu.memory_space<vmem>>, %arg3: memref<1x2048xf32, #tpu.memory_space<vmem>>, %arg4: memref<32x2048xf32, #tpu.memory_space<vmem>>) attributes {dimension_semantics = [#tpu.dimension_semantics<parallel>], iteration_bounds = array<i64: 8>, scalar_prefetch = 0 : i64, scratch_operands = 0 : i64, tpu.core_type = #tpu.core_type<tc>, window_params = [{pipeline_mode = #tpu.pipeline_mode<synchronous>, transform_indices = @transform_0, window_bounds = array<i64: 32, 8>}, {transform_indices = @transform_1, window_bounds = array<i64: 8, 2048>}, {transform_indices = @transform_2, window_bounds = array<i64: 1, 2048>}, {transform_indices = @transform_3, window_bounds = array<i64: 32, 2048>}]} {
    %c0 = arith.constant 0 : index
    %c0_0 = arith.constant 0 : index
    %0 = vector.load %arg1[%c0, %c0_0] : memref<32x8xbf16, #tpu.memory_space<vmem>>, vector<32x8xbf16>
    %c0_1 = arith.constant 0 : index
    %c0_2 = arith.constant 0 : index
    %1 = vector.load %arg2[%c0_1, %c0_2] : memref<8x2048xbf16, #tpu.memory_space<vmem>>, vector<8x2048xbf16>
    %cst = arith.constant dense<0.000000e+00> : vector<32x2048xf32>
    %2 = tpu.matmul %0, %1, %cst {dimension_numbers = #tpu.dot_dimension_numbers<[1], [0], [0], [1], [0, 0, 1, 1], [], []>} : vector<32x8xbf16>, vector<8x2048xbf16>, vector<32x2048xf32> -> vector<32x2048xf32>
    %c0_3 = arith.constant 0 : index
    %c0_4 = arith.constant 0 : index
    %3 = vector.load %arg3[%c0_3, %c0_4] : memref<1x2048xf32, #tpu.memory_space<vmem>>, vector<1x2048xf32>
    %4 = vector.broadcast %3 : vector<1x2048xf32> to vector<32x2048xf32>
    %5 = arith.mulf %4, %2 : vector<32x2048xf32>
    %c0_5 = arith.constant 0 : index
    %c0_6 = arith.constant 0 : index
    %6 = vector.load %arg4[%c0_5, %c0_6] : memref<32x2048xf32, #tpu.memory_space<vmem>>, vector<32x2048xf32>
    tpu.vector_store %arg4[%c0_5, %c0_6], %5 {strides = array<i32>} : memref<32x2048xf32, #tpu.memory_space<vmem>>, vector<32x2048xf32>,
    return
  }
  func.func @transform_0(%arg0: i32) -> (i32, i32) {
    %c0_i32 = arith.constant 0 : i32
    %c0_i32_0 = arith.constant 0 : i32
    %c0_i32_1 = arith.constant 0 : i32
    return %c0_i32, %c0_i32_0 : i32, i32
  }
  func.func @transform_1(%arg0: i32) -> (i32, i32) {
    %c0_i32 = arith.constant 0 : i32
    %c0_i32_0 = arith.constant 0 : i32
    return %c0_i32, %arg0 : i32, i32
  }
  func.func @transform_2(%arg0: i32) -> (i32, i32) {
    %c0_i32 = arith.constant 0 : i32
    %c0_i32_0 = arith.constant 0 : i32
    return %c0_i32, %arg0 : i32, i32
  }
  func.func @transform_3(%arg0: i32) -> (i32, i32) {
    %c0_i32 = arith.constant 0 : i32
    %c0_i32_0 = arith.constant 0 : i32
    return %c0_i32, %arg0 : i32, i32
  }
}

</mosaic_0001>

<llo_original>
// kernel: tpu_custom_call.1
$region0: #{tpu_custom_call.1}
  #allocation0 [shape = 'u32[]', space=smem, size = 0x4, offset = 0x4, fixed_abs, tag = 'smem constant byte address 0x4 - core index']
  #allocation1 [shape = 'u32[144,128]{1,0:T(1,128)}', space=vmem, size = 0x12000, scoped, tag = 'internal scratch']
  %s0 = inlined_call_operand.vmem [shape: bf16[32,8], index: 0, kind: input, shape index: {}]
  %s1 = inlined_call_operand.hbm [shape: bf16[8,16384], index: 1, kind: input, shape index: {}]
  %s2 = inlined_call_operand.hbm [shape: f32[1,16384], index: 2, kind: input, shape index: {}]
  %s3 = inlined_call_operand.hbm [shape: f32[32,16384], index: 3, kind: output, shape index: {}]
  %s4 = sld [smem:[#allocation0]]
  $region53: #{tpu_custom_call.1} parent=0
    _
  %s6 = ssub.s32 1, %s4
  %s7 = scalar_select 0, %s6, %s4
  $region1: #{tpu_custom_call.1} parent=0
    #allocation2 [shape = 'u8[65536]{0}', space=vmem, size = 0x10000, scoped, tag = 'input window, operand 1']
    #allocation3 [shape = 's32[2]{0}', space=sflag, size = 0x8, scoped, tag = 'scoped memory for tpu_custom_call.1']
    #allocation4 [shape = 's32[2]{0}', space=sflag, size = 0x8, scoped, tag = 'scoped memory for tpu_custom_call.1']
    #allocation5 [shape = 'u8[16384]{0}', space=vmem, size = 0x4000, scoped, tag = 'input window, operand 2']
    #allocation6 [shape = 's32[2]{0}', space=sflag, size = 0x8, scoped, tag = 'scoped memory for tpu_custom_call.1']
    #allocation7 [shape = 'u8[524288]{0}', space=vmem, size = 0x80000, scoped, tag = 'output window, operand 0']
    %8 = vsyncpa [#allocation3], 0
    %s9 = scalar_lea.sflag [#allocation3], 1
    %10 = vsyncpa %s9, 0
    %11 = vsyncpa [#allocation6], 0
    %s12 = scalar_lea.sflag [#allocation6], 1
    %13 = vsyncpa %s12, 0
    %14 = vsyncpa [#allocation4], 0
    %s15 = scalar_lea.sflag [#allocation4], 1
    %16 = vsyncpa %s15, 0
    loop: start=0, step=1, limit=10
    $region2: #{tpu_custom_call.1} parent=1 // loop_pre_header
      _
    $region3: #{tpu_custom_call.1} parent=1 // loop_header
      %s18 = sphi 0, %s22
      %p19 = scmp.ge.s32.totalorder %s18, 10
      %s26 = sphi 0, %s26
      %s28 = sphi 0, %s26
      %s29 = sphi 0, %s28
      %s43 = sphi 0, %s29
      %s49 = sphi 0, %s51
      %s52 = sphi 0, %s49
      %s53 = sphi 0, %s52
      %s69 = sphi 0, %s53
      %s75 = sphi 0, %s77
      %s78 = sphi 0, %s75
      %s79 = sphi 0, %s78
      %s95 = sphi 0, %s79
      %s101 = sphi 0, %s103
      %s104 = sphi 0, %s101
      %s105 = sphi 0, %s104
      %s121 = sphi 0, %s105
    $region4: #{tpu_custom_call.1} parent=1 // loop_header_branch
      %21 = sbr.rel (%p19) target = $region8
    $region5: #{tpu_custom_call.1} parent=1 // loop_body
      %s23 = ssub.s32 %s18, 1
      %s24 = ssub.s32 %s18, 2
      %s25 = sadd.s32 %s18, 1
      %s27 = sadd.s32 %s26, 1
      %p30 = scmp.eq.s32.totalorder %s18, 7
      %p31 = scmp.ne.s32.totalorder %s26, %s28
      %p32 = scmp.eq.s32.totalorder %s18, 0
      %p33 = por %p31, %p32
      %p34 = scmp.ne.s32.totalorder %s26, %s28
      %p35 = scmp.eq.s32.totalorder %s23, 7
      %p36 = por %p34, %p35
      %p37 = scmp.ne.s32.totalorder %s28, %s29
      %p38 = scmp.eq.s32.totalorder %s23, 0
      %p39 = por %p37, %p38
      %p40 = scmp.ne.s32.totalorder %s28, %s29
      %p41 = scmp.eq.s32.totalorder %s24, 7
      %p42 = por %p40, %p41
      %p44 = scmp.ne.s32.totalorder %s29, %s43
      %p45 = scmp.eq.s32.totalorder %s24, 0
      %p46 = por %p44, %p45
      %s47 = ssub.s32 %s18, %s25
      %p48 = scmp.eq.s32.totalorder %s47, 0
      %s50 = sadd.s32 %s49, 1
      %s51 = scalar_select %p48, %s49, %s50
      %p54 = pneg %p48
      %p55 = scmp.eq.s32.totalorder %s18, 7
      %p56 = por %p54, %p55
      %p57 = scmp.ne.s32.totalorder %s49, %s52
      %p58 = scmp.eq.s32.totalorder %s18, 0
      %p59 = por %p57, %p58
      %p60 = scmp.ne.s32.totalorder %s49, %s52
      %p61 = scmp.eq.s32.totalorder %s23, 7
      %p62 = por %p60, %p61
      %p63 = scmp.ne.s32.totalorder %s52, %s53
      %p64 = scmp.eq.s32.totalorder %s23, 0
      %p65 = por %p63, %p64
      %p66 = scmp.ne.s32.totalorder %s52, %s53
      %p67 = scmp.eq.s32.totalorder %s24, 7
      %p68 = por %p66, %p67
      %p70 = scmp.ne.s32.totalorder %s53, %s69
      %p71 = scmp.eq.s32.totalorder %s24, 0
      %p72 = por %p70, %p71
      %s73 = ssub.s32 %s18, %s25
      %p74 = scmp.eq.s32.totalorder %s73, 0
      %s76 = sadd.s32 %s75, 1
      %s77 = scalar_select %p74, %s75, %s76
      %p80 = pneg %p74
      %p81 = scmp.eq.s32.totalorder %s18, 7
      %p82 = por %p80, %p81
      %p83 = scmp.ne.s32.totalorder %s75, %s78
      %p84 = scmp.eq.s32.totalorder %s18, 0
      %p85 = por %p83, %p84
      %p86 = scmp.ne.s32.totalorder %s75, %s78
      %p87 = scmp.eq.s32.totalorder %s23, 7
      %p88 = por %p86, %p87
      %p89 = scmp.ne.s32.totalorder %s78, %s79
      %p90 = scmp.eq.s32.totalorder %s23, 0
      %p91 = por %p89, %p90
      %p92 = scmp.ne.s32.totalorder %s78, %s79
      %p93 = scmp.eq.s32.totalorder %s24, 7
      %p94 = por %p92, %p93
      %p96 = scmp.ne.s32.totalorder %s79, %s95
      %p97 = scmp.eq.s32.totalorder %s24, 0
      %p98 = por %p96, %p97
      %s99 = ssub.s32 %s18, %s25
      %p100 = scmp.eq.s32.totalorder %s99, 0
      %s102 = sadd.s32 %s101, 1
      %s103 = scalar_select %p100, %s101, %s102
      %p106 = pneg %p100
      %p107 = scmp.eq.s32.totalorder %s18, 7
      %p108 = por %p106, %p107
      %p109 = scmp.ne.s32.totalorder %s101, %s104
      %p110 = scmp.eq.s32.totalorder %s18, 0
      %p111 = por %p109, %p110
      %p112 = scmp.ne.s32.totalorder %s101, %s104
      %p113 = scmp.eq.s32.totalorder %s23, 7
      %p114 = por %p112, %p113
      %p115 = scmp.ne.s32.totalorder %s104, %s105
      %p116 = scmp.eq.s32.totalorder %s23, 0
      %p117 = por %p115, %p116
      %p118 = scmp.ne.s32.totalorder %s104, %s105
      %p119 = scmp.eq.s32.totalorder %s24, 7
      %p120 = por %p118, %p119
      %p122 = scmp.ne.s32.totalorder %s105, %s121
      %p123 = scmp.eq.s32.totalorder %s24, 0
      %p124 = por %p122, %p123
      %p125 = scmp.le.s32.totalorder 1, %s18
      %p126 = scmp.lt.s32.totalorder %s18, 9
      %p127 = pnand %p125, %p126
      %p128 = pneg %p127
      // Predicated region
      $region9: #{tpu_custom_call.1} parent=5 // pred_check
        _
      $region10: #{tpu_custom_call.1} parent=5 // pred_check_branch
        %130 = sbr.rel (%p127) target = $region12
      $region11: #{tpu_custom_call.1} parent=5 // pred_region
        %s131 = ssub.s32 %s18, 1
        // Predicated region
        $region13: #{tpu_custom_call.1} parent=11 // pred_check
          %p132 = pneg %p39
        $region14: #{tpu_custom_call.1} parent=11 // pred_check_branch
          %134 = sbr.rel (%p132) target = $region16
        $region15: #{tpu_custom_call.1} parent=11 // pred_region
          _
        $region16: #{tpu_custom_call.1} parent=11 // pred_fallthru
          _
      $region12: #{tpu_custom_call.1} parent=5 // pred_fallthru
        _
      %p135 = scmp.lt.s32.totalorder %s18, 8
      // Predicated region
      $region17: #{tpu_custom_call.1} parent=5 // pred_check
        %p136 = pneg %p135
      $region18: #{tpu_custom_call.1} parent=5 // pred_check_branch
        %138 = sbr.rel (%p136) target = $region20
      $region19: #{tpu_custom_call.1} parent=5 // pred_region
        // Predicated region
        $region21: #{tpu_custom_call.1} parent=19 // pred_check
          %p139 = pneg %p59
        $region22: #{tpu_custom_call.1} parent=19 // pred_check_branch
          %141 = sbr.rel (%p139) target = $region24
        $region23: #{tpu_custom_call.1} parent=19 // pred_region
          %s142 = sand.u32 %s49, 1
          %s143 = scalar_lea.sflag [#allocation3], %s142
          %s144 = sand.u32 %s49, 1
          %s145 = smul.addr %s144, 64
          %s146 = scalar_lea.vmem [#allocation2], %s145
          %s147 = smul.u32 16, %s18
          %s149 = ssub.s32 1024, 1024
          %150 = vsyncadd %s143, %s149
          %s151 = smul.addr %s147, 64
          %s152 = scalar_lea.hbm %s1, %s151
          %s154 = sshll.u32 %s146, 4
          %s155 = int_to_ptr.vmem [resolvable:$true] %s154
          %157 = dma.hbm_to_vmem [thread:$0]  %s152, 1024, %s155, %s143
        $region24: #{tpu_custom_call.1} parent=19 // pred_fallthru
          _
        // Predicated region
        $region25: #{tpu_custom_call.1} parent=19 // pred_check
          %p158 = pneg %p85
        $region26: #{tpu_custom_call.1} parent=19 // pred_check_branch
          %160 = sbr.rel (%p158) target = $region28
        $region27: #{tpu_custom_call.1} parent=19 // pred_region
          %s161 = sand.u32 %s75, 1
          %s162 = scalar_lea.sflag [#allocation6], %s161
          %s163 = sand.u32 %s75, 1
          %s164 = smul.addr %s163, 16
          %s165 = scalar_lea.vmem [#allocation5], %s164
          %s166 = smul.u32 16, %s18
          %s168 = ssub.s32 256, 256
          %169 = vsyncadd %s162, %s168
          %s170 = smul.addr %s166, 16
          %s171 = scalar_lea.hbm %s2, %s170
          %s173 = sshll.u32 %s165, 4
          %s174 = int_to_ptr.vmem [resolvable:$true] %s173
          %176 = dma.hbm_to_vmem [thread:$0]  %s171, 256, %s174, %s162
        $region28: #{tpu_custom_call.1} parent=19 // pred_fallthru
          _
      $region20: #{tpu_custom_call.1} parent=5 // pred_fallthru
        _
      %p177 = scmp.le.s32.totalorder 1, %s18
      %p178 = scmp.lt.s32.totalorder %s18, 9
      %p179 = pnand %p177, %p178
      %p180 = pneg %p179
      // Predicated region
      $region29: #{tpu_custom_call.1} parent=5 // pred_check
        _
      $region30: #{tpu_custom_call.1} parent=5 // pred_check_branch
        %182 = sbr.rel (%p179) target = $region32
      $region31: #{tpu_custom_call.1} parent=5 // pred_region
        %s183 = ssub.s32 %s18, 1
        %s184 = sand.u32 %s52, 1
        %s185 = scalar_lea.sflag [#allocation3], %s184
        %s186 = sand.u32 %s52, 1
        %s187 = smul.addr %s186, 64
        %s188 = scalar_lea.vmem [#allocation2], %s187
        // Predicated region
        $region33: #{tpu_custom_call.1} parent=31 // pred_check
          %p189 = pneg %p65
        $region34: #{tpu_custom_call.1} parent=31 // pred_check_branch
          %191 = sbr.rel (%p189) target = $region36
        $region35: #{tpu_custom_call.1} parent=31 // pred_region
          %192 = dma.done %s185, 1024
        $region36: #{tpu_custom_call.1} parent=31 // pred_fallthru
          _
        %s193 = sand.u32 %s78, 1
        %s194 = scalar_lea.sflag [#allocation6], %s193
        %s195 = sand.u32 %s78, 1
        %s196 = smul.addr %s195, 16
        %s197 = scalar_lea.vmem [#allocation5], %s196
        // Predicated region
        $region37: #{tpu_custom_call.1} parent=31 // pred_check
          %p198 = pneg %p91
        $region38: #{tpu_custom_call.1} parent=31 // pred_check_branch
          %200 = sbr.rel (%p198) target = $region40
        $region39: #{tpu_custom_call.1} parent=31 // pred_region
          %201 = dma.done %s194, 256
        $region40: #{tpu_custom_call.1} parent=31 // pred_fallthru
          _
        %p202 = pneg %p39
        %p203 = pneg %p36
        %s204 = sand.u32 %s52, 1
        %s205 = scalar_lea.sflag [#allocation3], %s204
        %s206 = sand.u32 %s52, 1
        %s207 = smul.addr %s206, 64
        %s208 = scalar_lea.vmem [#allocation2], %s207
        %p209 = pneg %p65
        %p210 = pneg %p62
        %s211 = sand.u32 %s78, 1
        %s212 = scalar_lea.sflag [#allocation6], %s211
        %s213 = sand.u32 %s78, 1
        %s214 = smul.addr %s213, 16
        %s215 = scalar_lea.vmem [#allocation5], %s214
        %p216 = pneg %p91
        %p217 = pneg %p88
        %p218 = pneg %p117
        %p219 = pneg %p114
        %s220 = sand.u32 %s104, 1
        %s221 = scalar_lea.sflag [#allocation4], %s220
        %s222 = sand.u32 %s104, 1
        %s223 = smul.addr %s222, 512
        %s224 = scalar_lea.vmem [#allocation7], %s223
        %s225 = smul.u32 16, %s23
        %s226 = smul.u32 16, %s23
        %s227 = smul.u32 16, %s23
        %v229 = vld [vmem:[%s0] sm:$0xf]
        %v230 = vld [vmem:[%s0 + $0x4] sm:$0xf]
        %v231 = vld [vmem:[%s0 + $0x8] sm:$0xf]
        %v232 = vld [vmem:[%s0 + $0xc] sm:$0xf]
        %v233 = vld [vmem:[%s188] sm:$0xff]
        %v234 = vld [vmem:[%s188 + $0x8] sm:$0xff]
        %v235 = vld [vmem:[%s188 + $0x10] sm:$0xff]
        %v236 = vld [vmem:[%s188 + $0x18] sm:$0xff]
        %v237 = vld [vmem:[%s188 + $0x20] sm:$0xff]
        %v238 = vld [vmem:[%s188 + $0x28] sm:$0xff]
        %v239 = vld [vmem:[%s188 + $0x30] sm:$0xff]
        %v240 = vld [vmem:[%s188 + $0x38] sm:$0xff]
        %v245 = vunpack.c.l.b16 %v229
        %v246 = vunpack.c.l.b16 %v230
        %v247 = vunpack.c.l.b16 %v231
        %v248 = vunpack.c.l.b16 %v232
        %v249 = vpack.c.b16 %v246, %v245
        %v250 = vpack.c.b16 %v248, %v247
        %v259 = vunpack.c.l.b16 %v233
        %v260 = vunpack.c.h.b16 %v233
        %v261 = vunpack.c.l.b16 %v234
        %v262 = vunpack.c.h.b16 %v234
        %v263 = vunpack.c.l.b16 %v235
        %v264 = vunpack.c.h.b16 %v235
        %v265 = vunpack.c.l.b16 %v236
        %v266 = vunpack.c.h.b16 %v236
        %v267 = vunpack.c.l.b16 %v237
        %v268 = vunpack.c.h.b16 %v237
        %v269 = vunpack.c.l.b16 %v238
        %v270 = vunpack.c.h.b16 %v238
        %v271 = vunpack.c.l.b16 %v239
        %v272 = vunpack.c.h.b16 %v239
        %v273 = vunpack.c.l.b16 %v240
        %v274 = vunpack.c.h.b16 %v240
        %v275 = vpack.c.b16 %v259, %v259
        %v276 = vpack.c.b16 %v260, %v260
        %v277 = vpack.c.b16 %v261, %v261
        %v278 = vpack.c.b16 %v262, %v262
        %v279 = vpack.c.b16 %v263, %v263
        %v280 = vpack.c.b16 %v264, %v264
        %v281 = vpack.c.b16 %v265, %v265
        %v282 = vpack.c.b16 %v266, %v266
        %v283 = vpack.c.b16 %v267, %v267
        %v284 = vpack.c.b16 %v268, %v268
        %v285 = vpack.c.b16 %v269, %v269
        %v286 = vpack.c.b16 %v270, %v270
        %v287 = vpack.c.b16 %v271, %v271
        %v288 = vpack.c.b16 %v272, %v272
        %v289 = vpack.c.b16 %v273, %v273
        %v290 = vpack.c.b16 %v274, %v274
        %vm291 = vcmask 64512
        %v293 = vsel %vm291, %v249, 0
        %v296 = vsel %vm291, %v250, 0
        %vm298 = vcmask 1043456
        %v300 = vsel %vm298, %v275, 0
        %v303 = vsel %vm298, %v276, 0
        %v306 = vsel %vm298, %v277, 0
        %v309 = vsel %vm298, %v278, 0
        %v312 = vsel %vm298, %v279, 0
        %v315 = vsel %vm298, %v280, 0
        %v318 = vsel %vm298, %v281, 0
        %v321 = vsel %vm298, %v282, 0
        %v324 = vsel %vm298, %v283, 0
        %v327 = vsel %vm298, %v284, 0
        %v330 = vsel %vm298, %v285, 0
        %v333 = vsel %vm298, %v286, 0
        %v336 = vsel %vm298, %v287, 0
        %v339 = vsel %vm298, %v288, 0
        %v342 = vsel %vm298, %v289, 0
        %v345 = vsel %vm298, %v290, 0
        %347 = vmatprep.subr.bf16.mxu0 0
        %348 = vmatpush1.bf16.msra.mxu0 0
        %349 = vmatprep.subr.bf16.mxu0 0
        %350 = vmatpush1.bf16.msra.mxu0 0
        %351 = vmatprep.subr.bf16.mxu0 0
        %352 = vmatpush1.bf16.msra.mxu0 0
        %353 = vmatprep.subr.bf16.mxu0 0
        %354 = vmatpush1.bf16.msra.mxu0 0
        %355 = vmatprep.subr.bf16.mxu0 0
        %356 = vmatpush1.bf16.msra.mxu0 0
        %357 = vmatprep.subr.bf16.mxu0 0
        %358 = vmatpush1.bf16.msra.mxu0 0
        %359 = vmatprep.subr.bf16.mxu0 0
        %360 = vmatpush1.bf16.msra.mxu0 0
        %361 = vmatprep.subr.bf16.mxu0 %v303
        %362 = vmatpush1.bf16.msra.mxu0 %v300
        %363 = vmatprep.subr.bf16.mxu0 0
        %364 = vmatpush2.bf16.msra.mxu0 0
        %365 = vmatprep.subr.bf16.mxu0 0
        %366 = vmatpush2.bf16.msra.mxu0 0
        %367 = vmatprep.subr.bf16.mxu0 0
        %368 = vmatpush2.bf16.msra.mxu0 0
        %369 = vmatprep.subr.bf16.mxu0 0
        %370 = vmatpush2.bf16.msra.mxu0 0
        %371 = vmatprep.subr.bf16.mxu0 0
        %372 = vmatpush2.bf16.msra.mxu0 0
        %373 = vmatprep.subr.bf16.mxu0 0
        %374 = vmatpush2.bf16.msra.mxu0 0
        %375 = vmatprep.subr.bf16.mxu0 0
        %376 = vmatpush2.bf16.msra.mxu0 0
        %377 = vmatprep.subr.bf16.mxu0 0
        %378 = vmatpush2.bf16.msra.mxu0 0
        %379 = vmatprep.mubr.bf16.mxu0 0
        %380 = vmatmul.mubr.bf16.gmra.mxu0 %v293
        %v381 = vpop.f32.mrf.mxu0
        %v382 = vadd.f32 0.0, %v381
        %v383 = vpop.f32.mrf.mxu0
        %v384 = vadd.f32 0.0, %v383
        %v385 = vpop.f32.mrf.mxu0
        %v386 = vadd.f32 0.0, %v385
        %v387 = vpop.f32.mrf.mxu0
        %v388 = vadd.f32 0.0, %v387
        %389 = vmatprep.mubr.bf16.mxu0 0
        %390 = vmatmul.mubr.bf16.gmra.mxu0 %v296
        %v391 = vpop.f32.mrf.mxu0
        %v392 = vadd.f32 0.0, %v391
        %v393 = vpop.f32.mrf.mxu0
        %v394 = vadd.f32 0.0, %v393
        %v395 = vpop.f32.mrf.mxu0
        %v396 = vadd.f32 0.0, %v395
        %v397 = vpop.f32.mrf.mxu0
        %v398 = vadd.f32 0.0, %v397
        %399 = vdwg.mxu0
        %400 = vmatprep.subr.bf16.mxu0 0
        %401 = vmatpush1.bf16.msra.mxu0 0
        %402 = vmatprep.subr.bf16.mxu0 0
        %403 = vmatpush1.bf16.msra.mxu0 0
        %404 = vmatprep.subr.bf16.mxu0 0
        %405 = vmatpush1.bf16.msra.mxu0 0
        %406 = vmatprep.subr.bf16.mxu0 0
        %407 = vmatpush1.bf16.msra.mxu0 0
        %408 = vmatprep.subr.bf16.mxu0 0
        %409 = vmatpush1.bf16.msra.mxu0 0
        %410 = vmatprep.subr.bf16.mxu0 0
        %411 = vmatpush1.bf16.msra.mxu0 0
        %412 = vmatprep.subr.bf16.mxu0 0
        %413 = vmatpush1.bf16.msra.mxu0 0
        %414 = vmatprep.subr.bf16.mxu0 %v309
        %415 = vmatpush1.bf16.msra.mxu0 %v306
        %416 = vmatprep.subr.bf16.mxu0 0
        %417 = vmatpush2.bf16.msra.mxu0 0
        %418 = vmatprep.subr.bf16.mxu0 0
        %419 = vmatpush2.bf16.msra.mxu0 0
        %420 = vmatprep.subr.bf16.mxu0 0
        %421 = vmatpush2.bf16.msra.mxu0 0
        %422 = vmatprep.subr.bf16.mxu0 0
        %423 = vmatpush2.bf16.msra.mxu0 0
        %424 = vmatprep.subr.bf16.mxu0 0
        %425 = vmatpush2.bf16.msra.mxu0 0
        %426 = vmatprep.subr.bf16.mxu0 0
        %427 = vmatpush2.bf16.msra.mxu0 0
        %428 = vmatprep.subr.bf16.mxu0 0
        %429 = vmatpush2.bf16.msra.mxu0 0
        %430 = vmatprep.subr.bf16.mxu0 0
        %431 = vmatpush2.bf16.msra.mxu0 0
        %432 = vmatprep.mubr.bf16.mxu0 0
        %433 = vmatmul.mubr.bf16.gmra.mxu0 %v293
        %v434 = vpop.f32.mrf.mxu0
        %v435 = vadd.f32 0.0, %v434
        %v436 = vpop.f32.mrf.mxu0
        %v437 = vadd.f32 0.0, %v436
        %v438 = vpop.f32.mrf.mxu0
        %v439 = vadd.f32 0.0, %v438
        %v440 = vpop.f32.mrf.mxu0
        %v441 = vadd.f32 0.0, %v440
        %442 = vmatprep.mubr.bf16.mxu0 0
        %443 = vmatmul.mubr.bf16.gmra.mxu0 %v296
        %v444 = vpop.f32.mrf.mxu0
        %v445 = vadd.f32 0.0, %v444
        %v446 = vpop.f32.mrf.mxu0
        %v447 = vadd.f32 0.0, %v446
        %v448 = vpop.f32.mrf.mxu0
        %v449 = vadd.f32 0.0, %v448
        %v450 = vpop.f32.mrf.mxu0
        %v451 = vadd.f32 0.0, %v450
        %452 = vdwg.mxu0
        %453 = vmatprep.subr.bf16.mxu0 0
        %454 = vmatpush1.bf16.msra.mxu0 0
        %455 = vmatprep.subr.bf16.mxu0 0
        %456 = vmatpush1.bf16.msra.mxu0 0
        %457 = vmatprep.subr.bf16.mxu0 0
        %458 = vmatpush1.bf16.msra.mxu0 0
        %459 = vmatprep.subr.bf16.mxu0 0
        %460 = vmatpush1.bf16.msra.mxu0 0
        %461 = vmatprep.subr.bf16.mxu0 0
        %462 = vmatpush1.bf16.msra.mxu0 0
        %463 = vmatprep.subr.bf16.mxu0 0
        %464 = vmatpush1.bf16.msra.mxu0 0
        %465 = vmatprep.subr.bf16.mxu0 0
        %466 = vmatpush1.bf16.msra.mxu0 0
        %467 = vmatprep.subr.bf16.mxu0 %v315
        %468 = vmatpush1.bf16.msra.mxu0 %v312
        %469 = vmatprep.subr.bf16.mxu0 0
        %470 = vmatpush2.bf16.msra.mxu0 0
        %471 = vmatprep.subr.bf16.mxu0 0
        %472 = vmatpush2.bf16.msra.mxu0 0
        %473 = vmatprep.subr.bf16.mxu0 0
        %474 = vmatpush2.bf16.msra.mxu0 0
        %475 = vmatprep.subr.bf16.mxu0 0
        %476 = vmatpush2.bf16.msra.mxu0 0
        %477 = vmatprep.subr.bf16.mxu0 0
        %478 = vmatpush2.bf16.msra.mxu0 0
        %479 = vmatprep.subr.bf16.mxu0 0
        %480 = vmatpush2.bf16.msra.mxu0 0
        %481 = vmatprep.subr.bf16.mxu0 0
        %482 = vmatpush2.bf16.msra.mxu0 0
        %483 = vmatprep.subr.bf16.mxu0 0
        %484 = vmatpush2.bf16.msra.mxu0 0
        %485 = vmatprep.mubr.bf16.mxu0 0
        %486 = vmatmul.mubr.bf16.gmra.mxu0 %v293
        %v487 = vpop.f32.mrf.mxu0
        %v488 = vadd.f32 0.0, %v487
        %v489 = vpop.f32.mrf.mxu0
        %v490 = vadd.f32 0.0, %v489
        %v491 = vpop.f32.mrf.mxu0
        %v492 = vadd.f32 0.0, %v491
        %v493 = vpop.f32.mrf.mxu0
        %v494 = vadd.f32 0.0, %v493
        %495 = vmatprep.mubr.bf16.mxu0 0
        %496 = vmatmul.mubr.bf16.gmra.mxu0 %v296
        %v497 = vpop.f32.mrf.mxu0
        %v498 = vadd.f32 0.0, %v497
        %v499 = vpop.f32.mrf.mxu0
        %v500 = vadd.f32 0.0, %v499
        %v501 = vpop.f32.mrf.mxu0
        %v502 = vadd.f32 0.0, %v501
        %v503 = vpop.f32.mrf.mxu0
        %v504 = vadd.f32 0.0, %v503
        %505 = vdwg.mxu0
        %506 = vmatprep.subr.bf16.mxu0 0
        %507 = vmatpush1.bf16.msra.mxu0 0
        %508 = vmatprep.subr.bf16.mxu0 0
        %509 = vmatpush1.bf16.msra.mxu0 0
        %510 = vmatprep.subr.bf16.mxu0 0
        %511 = vmatpush1.bf16.msra.mxu0 0
        %512 = vmatprep.subr.bf16.mxu0 0
        %513 = vmatpush1.bf16.msra.mxu0 0
        %514 = vmatprep.subr.bf16.mxu0 0
        %515 = vmatpush1.bf16.msra.mxu0 0
        %516 = vmatprep.subr.bf16.mxu0 0
        %517 = vmatpush1.bf16.msra.mxu0 0
        %518 = vmatprep.subr.bf16.mxu0 0
        %519 = vmatpush1.bf16.msra.mxu0 0
        %520 = vmatprep.subr.bf16.mxu0 %v321
        %521 = vmatpush1.bf16.msra.mxu0 %v318
        %522 = vmatprep.subr.bf16.mxu0 0
        %523 = vmatpush2.bf16.msra.mxu0 0
        %524 = vmatprep.subr.bf16.mxu0 0
        %525 = vmatpush2.bf16.msra.mxu0 0
        %526 = vmatprep.subr.bf16.mxu0 0
        %527 = vmatpush2.bf16.msra.mxu0 0
        %528 = vmatprep.subr.bf16.mxu0 0
        %529 = vmatpush2.bf16.msra.mxu0 0
        %530 = vmatprep.subr.bf16.mxu0 0
        %531 = vmatpush2.bf16.msra.mxu0 0
        %532 = vmatprep.subr.bf16.mxu0 0
        %533 = vmatpush2.bf16.msra.mxu0 0
        %534 = vmatprep.subr.bf16.mxu0 0
        %535 = vmatpush2.bf16.msra.mxu0 0
        %536 = vmatprep.subr.bf16.mxu0 0
        %537 = vmatpush2.bf16.msra.mxu0 0
        %538 = vmatprep.mubr.bf16.mxu0 0
        %539 = vmatmul.mubr.bf16.gmra.mxu0 %v293
        %v540 = vpop.f32.mrf.mxu0
        %v541 = vadd.f32 0.0, %v540
        %v542 = vpop.f32.mrf.mxu0
        %v543 = vadd.f32 0.0, %v542
        %v544 = vpop.f32.mrf.mxu0
        %v545 = vadd.f32 0.0, %v544
        %v546 = vpop.f32.mrf.mxu0
        %v547 = vadd.f32 0.0, %v546
        %548 = vmatprep.mubr.bf16.mxu0 0
        %549 = vmatmul.mubr.bf16.gmra.mxu0 %v296
        %v550 = vpop.f32.mrf.mxu0
        %v551 = vadd.f32 0.0, %v550
        %v552 = vpop.f32.mrf.mxu0
        %v553 = vadd.f32 0.0, %v552
        %v554 = vpop.f32.mrf.mxu0
        %v555 = vadd.f32 0.0, %v554
        %v556 = vpop.f32.mrf.mxu0
        %v557 = vadd.f32 0.0, %v556
        %558 = vdwg.mxu0
        %559 = vmatprep.subr.bf16.mxu0 0
        %560 = vmatpush1.bf16.msra.mxu0 0
        %561 = vmatprep.subr.bf16.mxu0 0
        %562 = vmatpush1.bf16.msra.mxu0 0
        %563 = vmatprep.subr.bf16.mxu0 0
        %564 = vmatpush1.bf16.msra.mxu0 0
        %565 = vmatprep.subr.bf16.mxu0 0
        %566 = vmatpush1.bf16.msra.mxu0 0
        %567 = vmatprep.subr.bf16.mxu0 0
        %568 = vmatpush1.bf16.msra.mxu0 0
        %569 = vmatprep.subr.bf16.mxu0 0
        %570 = vmatpush1.bf16.msra.mxu0 0
        %571 = vmatprep.subr.bf16.mxu0 0
        %572 = vmatpush1.bf16.msra.mxu0 0
        %573 = vmatprep.subr.bf16.mxu0 %v327
        %574 = vmatpush1.bf16.msra.mxu0 %v324
        %575 = vmatprep.subr.bf16.mxu0 0
        %576 = vmatpush2.bf16.msra.mxu0 0
        %577 = vmatprep.subr.bf16.mxu0 0
        %578 = vmatpush2.bf16.msra.mxu0 0
        %579 = vmatprep.subr.bf16.mxu0 0
        %580 = vmatpush2.bf16.msra.mxu0 0
        %581 = vmatprep.subr.bf16.mxu0 0
        %582 = vmatpush2.bf16.msra.mxu0 0
        %583 = vmatprep.subr.bf16.mxu0 0
        %584 = vmatpush2.bf16.msra.mxu0 0
        %585 = vmatprep.subr.bf16.mxu0 0
        %586 = vmatpush2.bf16.msra.mxu0 0
        %587 = vmatprep.subr.bf16.mxu0 0
        %588 = vmatpush2.bf16.msra.mxu0 0
        %589 = vmatprep.subr.bf16.mxu0 0
        %590 = vmatpush2.bf16.msra.mxu0 0
        %591 = vmatprep.mubr.bf16.mxu0 0
        %592 = vmatmul.mubr.bf16.gmra.mxu0 %v293
        %v593 = vpop.f32.mrf.mxu0
        %v594 = vadd.f32 0.0, %v593
        %v595 = vpop.f32.mrf.mxu0
        %v596 = vadd.f32 0.0, %v595
        %v597 = vpop.f32.mrf.mxu0
        %v598 = vadd.f32 0.0, %v597
        %v599 = vpop.f32.mrf.mxu0
        %v600 = vadd.f32 0.0, %v599
        %601 = vmatprep.mubr.bf16.mxu0 0
        %602 = vmatmul.mubr.bf16.gmra.mxu0 %v296
        %v603 = vpop.f32.mrf.mxu0
        %v604 = vadd.f32 0.0, %v603
        %v605 = vpop.f32.mrf.mxu0
        %v606 = vadd.f32 0.0, %v605
        %v607 = vpop.f32.mrf.mxu0
        %v608 = vadd.f32 0.0, %v607
        %v609 = vpop.f32.mrf.mxu0
        %v610 = vadd.f32 0.0, %v609
        %611 = vdwg.mxu0
        %612 = vmatprep.subr.bf16.mxu0 0
        %613 = vmatpush1.bf16.msra.mxu0 0
        %614 = vmatprep.subr.bf16.mxu0 0
        %615 = vmatpush1.bf16.msra.mxu0 0
        %616 = vmatprep.subr.bf16.mxu0 0
        %617 = vmatpush1.bf16.msra.mxu0 0
        %618 = vmatprep.subr.bf16.mxu0 0
        %619 = vmatpush1.bf16.msra.mxu0 0
        %620 = vmatprep.subr.bf16.mxu0 0
        %621 = vmatpush1.bf16.msra.mxu0 0
        %622 = vmatprep.subr.bf16.mxu0 0
        %623 = vmatpush1.bf16.msra.mxu0 0
        %624 = vmatprep.subr.bf16.mxu0 0
        %625 = vmatpush1.bf16.msra.mxu0 0
        %626 = vmatprep.subr.bf16.mxu0 %v333
        %627 = vmatpush1.bf16.msra.mxu0 %v330
        %628 = vmatprep.subr.bf16.mxu0 0
        %629 = vmatpush2.bf16.msra.mxu0 0
        %630 = vmatprep.subr.bf16.mxu0 0
        %631 = vmatpush2.bf16.msra.mxu0 0
        %632 = vmatprep.subr.bf16.mxu0 0
        %633 = vmatpush2.bf16.msra.mxu0 0
        %634 = vmatprep.subr.bf16.mxu0 0
        %635 = vmatpush2.bf16.msra.mxu0 0
        %636 = vmatprep.subr.bf16.mxu0 0
        %637 = vmatpush2.bf16.msra.mxu0 0
        %638 = vmatprep.subr.bf16.mxu0 0
        %639 = vmatpush2.bf16.msra.mxu0 0
        %640 = vmatprep.subr.bf16.mxu0 0
        %641 = vmatpush2.bf16.msra.mxu0 0
        %642 = vmatprep.subr.bf16.mxu0 0
        %643 = vmatpush2.bf16.msra.mxu0 0
        %644 = vmatprep.mubr.bf16.mxu0 0
        %645 = vmatmul.mubr.bf16.gmra.mxu0 %v293
        %v646 = vpop.f32.mrf.mxu0
        %v647 = vadd.f32 0.0, %v646
        %v648 = vpop.f32.mrf.mxu0
        %v649 = vadd.f32 0.0, %v648
        %v650 = vpop.f32.mrf.mxu0
        %v651 = vadd.f32 0.0, %v650
        %v652 = vpop.f32.mrf.mxu0
        %v653 = vadd.f32 0.0, %v652
        %654 = vmatprep.mubr.bf16.mxu0 0
        %655 = vmatmul.mubr.bf16.gmra.mxu0 %v296
        %v656 = vpop.f32.mrf.mxu0
        %v657 = vadd.f32 0.0, %v656
        %v658 = vpop.f32.mrf.mxu0
        %v659 = vadd.f32 0.0, %v658
        %v660 = vpop.f32.mrf.mxu0
        %v661 = vadd.f32 0.0, %v660
        %v662 = vpop.f32.mrf.mxu0
        %v663 = vadd.f32 0.0, %v662
        %664 = vdwg.mxu0
        %665 = vmatprep.subr.bf16.mxu0 0
        %666 = vmatpush1.bf16.msra.mxu0 0
        %667 = vmatprep.subr.bf16.mxu0 0
        %668 = vmatpush1.bf16.msra.mxu0 0
        %669 = vmatprep.subr.bf16.mxu0 0
        %670 = vmatpush1.bf16.msra.mxu0 0
        %671 = vmatprep.subr.bf16.mxu0 0
        %672 = vmatpush1.bf16.msra.mxu0 0
        %673 = vmatprep.subr.bf16.mxu0 0
        %674 = vmatpush1.bf16.msra.mxu0 0
        %675 = vmatprep.subr.bf16.mxu0 0
        %676 = vmatpush1.bf16.msra.mxu0 0
        %677 = vmatprep.subr.bf16.mxu0 0
        %678 = vmatpush1.bf16.msra.mxu0 0
        %679 = vmatprep.subr.bf16.mxu0 %v339
        %680 = vmatpush1.bf16.msra.mxu0 %v336
        %681 = vmatprep.subr.bf16.mxu0 0
        %682 = vmatpush2.bf16.msra.mxu0 0
        %683 = vmatprep.subr.bf16.mxu0 0
        %684 = vmatpush2.bf16.msra.mxu0 0
        %685 = vmatprep.subr.bf16.mxu0 0
        %686 = vmatpush2.bf16.msra.mxu0 0
        %687 = vmatprep.subr.bf16.mxu0 0
        %688 = vmatpush2.bf16.msra.mxu0 0
        %689 = vmatprep.subr.bf16.mxu0 0
        %690 = vmatpush2.bf16.msra.mxu0 0
        %691 = vmatprep.subr.bf16.mxu0 0
        %692 = vmatpush2.bf16.msra.mxu0 0
        %693 = vmatprep.subr.bf16.mxu0 0
        %694 = vmatpush2.bf16.msra.mxu0 0
        %695 = vmatprep.subr.bf16.mxu0 0
        %696 = vmatpush2.bf16.msra.mxu0 0
        %697 = vmatprep.mubr.bf16.mxu0 0
        %698 = vmatmul.mubr.bf16.gmra.mxu0 %v293
        %v699 = vpop.f32.mrf.mxu0
        %v700 = vadd.f32 0.0, %v699
        %v701 = vpop.f32.mrf.mxu0
        %v702 = vadd.f32 0.0, %v701
        %v703 = vpop.f32.mrf.mxu0
        %v704 = vadd.f32 0.0, %v703
        %v705 = vpop.f32.mrf.mxu0
        %v706 = vadd.f32 0.0, %v705
        %707 = vmatprep.mubr.bf16.mxu0 0
        %708 = vmatmul.mubr.bf16.gmra.mxu0 %v296
        %v709 = vpop.f32.mrf.mxu0
        %v710 = vadd.f32 0.0, %v709
        %v711 = vpop.f32.mrf.mxu0
        %v712 = vadd.f32 0.0, %v711
        %v713 = vpop.f32.mrf.mxu0
        %v714 = vadd.f32 0.0, %v713
        %v715 = vpop.f32.mrf.mxu0
        %v716 = vadd.f32 0.0, %v715
        %717 = vdwg.mxu0
        %718 = vmatprep.subr.bf16.mxu0 0
        %719 = vmatpush1.bf16.msra.mxu0 0
        %720 = vmatprep.subr.bf16.mxu0 0
        %721 = vmatpush1.bf16.msra.mxu0 0
        %722 = vmatprep.subr.bf16.mxu0 0
        %723 = vmatpush1.bf16.msra.mxu0 0
        %724 = vmatprep.subr.bf16.mxu0 0
        %725 = vmatpush1.bf16.msra.mxu0 0
        %726 = vmatprep.subr.bf16.mxu0 0
        %727 = vmatpush1.bf16.msra.mxu0 0
        %728 = vmatprep.subr.bf16.mxu0 0
        %729 = vmatpush1.bf16.msra.mxu0 0
        %730 = vmatprep.subr.bf16.mxu0 0
        %731 = vmatpush1.bf16.msra.mxu0 0
        %732 = vmatprep.subr.bf16.mxu0 %v345
        %733 = vmatpush1.bf16.msra.mxu0 %v342
        %734 = vmatprep.subr.bf16.mxu0 0
        %735 = vmatpush2.bf16.msra.mxu0 0
        %736 = vmatprep.subr.bf16.mxu0 0
        %737 = vmatpush2.bf16.msra.mxu0 0
        %738 = vmatprep.subr.bf16.mxu0 0
        %739 = vmatpush2.bf16.msra.mxu0 0
        %740 = vmatprep.subr.bf16.mxu0 0
        %741 = vmatpush2.bf16.msra.mxu0 0
        %742 = vmatprep.subr.bf16.mxu0 0
        %743 = vmatpush2.bf16.msra.mxu0 0
        %744 = vmatprep.subr.bf16.mxu0 0
        %745 = vmatpush2.bf16.msra.mxu0 0
        %746 = vmatprep.subr.bf16.mxu0 0
        %747 = vmatpush2.bf16.msra.mxu0 0
        %748 = vmatprep.subr.bf16.mxu0 0
        %749 = vmatpush2.bf16.msra.mxu0 0
        %750 = vmatprep.mubr.bf16.mxu0 0
        %751 = vmatmul.mubr.bf16.gmra.mxu0 %v293
        %v752 = vpop.f32.mrf.mxu0
        %v753 = vadd.f32 0.0, %v752
        %v754 = vpop.f32.mrf.mxu0
        %v755 = vadd.f32 0.0, %v754
        %v756 = vpop.f32.mrf.mxu0
        %v757 = vadd.f32 0.0, %v756
        %v758 = vpop.f32.mrf.mxu0
        %v759 = vadd.f32 0.0, %v758
        %760 = vmatprep.mubr.bf16.mxu0 0
        %761 = vmatmul.mubr.bf16.gmra.mxu0 %v296
        %v762 = vpop.f32.mrf.mxu0
        %v763 = vadd.f32 0.0, %v762
        %v764 = vpop.f32.mrf.mxu0
        %v765 = vadd.f32 0.0, %v764
        %v766 = vpop.f32.mrf.mxu0
        %v767 = vadd.f32 0.0, %v766
        %v768 = vpop.f32.mrf.mxu0
        %v769 = vadd.f32 0.0, %v768
        %770 = vdwg.mxu0
        %v771 = vld [vmem:[%s197] sm:$0xff]
        %v772 = vld [vmem:[%s197 + $0x8] sm:$0xff]
        %v775 = vlaneseq
        %v776 = vshrl.u32 %v775, 7
        %v777 = vsub.s32 0, %v776
        %v778 = vrot.slane %v771, %v777
        %v779 = vlaneseq
        %v780 = vshrl.u32 %v779, 7
        %v781 = vsub.s32 1, %v780
        %v782 = vrot.slane %v771, %v781
        %v783 = vlaneseq
        %v784 = vshrl.u32 %v783, 7
        %v785 = vsub.s32 2, %v784
        %v786 = vrot.slane %v771, %v785
        %v787 = vlaneseq
        %v788 = vshrl.u32 %v787, 7
        %v789 = vsub.s32 3, %v788
        %v790 = vrot.slane %v771, %v789
        %v791 = vlaneseq
        %v792 = vshrl.u32 %v791, 7
        %v793 = vsub.s32 4, %v792
        %v794 = vrot.slane %v771, %v793
        %v795 = vlaneseq
        %v796 = vshrl.u32 %v795, 7
        %v797 = vsub.s32 5, %v796
        %v798 = vrot.slane %v771, %v797
        %v799 = vlaneseq
        %v800 = vshrl.u32 %v799, 7
        %v801 = vsub.s32 6, %v800
        %v802 = vrot.slane %v771, %v801
        %v803 = vlaneseq
        %v804 = vshrl.u32 %v803, 7
        %v805 = vsub.s32 7, %v804
        %v806 = vrot.slane %v771, %v805
        %v807 = vlaneseq
        %v808 = vshrl.u32 %v807, 7
        %v809 = vsub.s32 0, %v808
        %v810 = vrot.slane %v772, %v809
        %v811 = vlaneseq
        %v812 = vshrl.u32 %v811, 7
        %v813 = vsub.s32 1, %v812
        %v814 = vrot.slane %v772, %v813
        %v815 = vlaneseq
        %v816 = vshrl.u32 %v815, 7
        %v817 = vsub.s32 2, %v816
        %v818 = vrot.slane %v772, %v817
        %v819 = vlaneseq
        %v820 = vshrl.u32 %v819, 7
        %v821 = vsub.s32 3, %v820
        %v822 = vrot.slane %v772, %v821
        %v823 = vlaneseq
        %v824 = vshrl.u32 %v823, 7
        %v825 = vsub.s32 4, %v824
        %v826 = vrot.slane %v772, %v825
        %v827 = vlaneseq
        %v828 = vshrl.u32 %v827, 7
        %v829 = vsub.s32 5, %v828
        %v830 = vrot.slane %v772, %v829
        %v831 = vlaneseq
        %v832 = vshrl.u32 %v831, 7
        %v833 = vsub.s32 6, %v832
        %v834 = vrot.slane %v772, %v833
        %v835 = vlaneseq
        %v836 = vshrl.u32 %v835, 7
        %v837 = vsub.s32 7, %v836
        %v838 = vrot.slane %v772, %v837
        %v855 = vmul.f32 %v778, %v382
        %v856 = vmul.f32 %v782, %v384
        %v857 = vmul.f32 %v786, %v435
        %v858 = vmul.f32 %v790, %v437
        %v859 = vmul.f32 %v794, %v488
        %v860 = vmul.f32 %v798, %v490
        %v861 = vmul.f32 %v802, %v541
        %v862 = vmul.f32 %v806, %v543
        %v863 = vmul.f32 %v810, %v594
        %v864 = vmul.f32 %v814, %v596
        %v865 = vmul.f32 %v818, %v647
        %v866 = vmul.f32 %v822, %v649
        %v867 = vmul.f32 %v826, %v700
        %v868 = vmul.f32 %v830, %v702
        %v869 = vmul.f32 %v834, %v753
        %v870 = vmul.f32 %v838, %v755
        %v871 = vmul.f32 %v778, %v386
        %v872 = vmul.f32 %v782, %v388
        %v873 = vmul.f32 %v786, %v439
        %v874 = vmul.f32 %v790, %v441
        %v875 = vmul.f32 %v794, %v492
        %v876 = vmul.f32 %v798, %v494
        %v877 = vmul.f32 %v802, %v545
        %v878 = vmul.f32 %v806, %v547
        %v879 = vmul.f32 %v810, %v598
        %v880 = vmul.f32 %v814, %v600
        %v881 = vmul.f32 %v818, %v651
        %v882 = vmul.f32 %v822, %v653
        %v883 = vmul.f32 %v826, %v704
        %v884 = vmul.f32 %v830, %v706
        %v885 = vmul.f32 %v834, %v757
        %v886 = vmul.f32 %v838, %v759
        %v887 = vmul.f32 %v778, %v392
        %v888 = vmul.f32 %v782, %v394
        %v889 = vmul.f32 %v786, %v445
        %v890 = vmul.f32 %v790, %v447
        %v891 = vmul.f32 %v794, %v498
        %v892 = vmul.f32 %v798, %v500
        %v893 = vmul.f32 %v802, %v551
        %v894 = vmul.f32 %v806, %v553
        %v895 = vmul.f32 %v810, %v604
        %v896 = vmul.f32 %v814, %v606
        %v897 = vmul.f32 %v818, %v657
        %v898 = vmul.f32 %v822, %v659
        %v899 = vmul.f32 %v826, %v710
        %v900 = vmul.f32 %v830, %v712
        %v901 = vmul.f32 %v834, %v763
        %v902 = vmul.f32 %v838, %v765
        %v903 = vmul.f32 %v778, %v396
        %v904 = vmul.f32 %v782, %v398
        %v905 = vmul.f32 %v786, %v449
        %v906 = vmul.f32 %v790, %v451
        %v907 = vmul.f32 %v794, %v502
        %v908 = vmul.f32 %v798, %v504
        %v909 = vmul.f32 %v802, %v555
        %v910 = vmul.f32 %v806, %v557
        %v911 = vmul.f32 %v810, %v608
        %v912 = vmul.f32 %v814, %v610
        %v913 = vmul.f32 %v818, %v661
        %v914 = vmul.f32 %v822, %v663
        %v915 = vmul.f32 %v826, %v714
        %v916 = vmul.f32 %v830, %v716
        %v917 = vmul.f32 %v834, %v767
        %v918 = vmul.f32 %v838, %v769
        %919 = vst [vmem:[%s224] sm:$0xff] %v855
        %920 = vst [vmem:[%s224 + $0x8] sm:$0xff] %v856
        %921 = vst [vmem:[%s224 + $0x10] sm:$0xff] %v857
        %922 = vst [vmem:[%s224 + $0x18] sm:$0xff] %v858
        %923 = vst [vmem:[%s224 + $0x20] sm:$0xff] %v859
        %924 = vst [vmem:[%s224 + $0x28] sm:$0xff] %v860
        %925 = vst [vmem:[%s224 + $0x30] sm:$0xff] %v861
        %926 = vst [vmem:[%s224 + $0x38] sm:$0xff] %v862
        %927 = vst [vmem:[%s224 + $0x40] sm:$0xff] %v863
        %928 = vst [vmem:[%s224 + $0x48] sm:$0xff] %v864
        %929 = vst [vmem:[%s224 + $0x50] sm:$0xff] %v865
        %930 = vst [vmem:[%s224 + $0x58] sm:$0xff] %v866
        %931 = vst [vmem:[%s224 + $0x60] sm:$0xff] %v867
        %932 = vst [vmem:[%s224 + $0x68] sm:$0xff] %v868
        %933 = vst [vmem:[%s224 + $0x70] sm:$0xff] %v869
        %934 = vst [vmem:[%s224 + $0x78] sm:$0xff] %v870
        %935 = vst [vmem:[%s224 + $0x80] sm:$0xff] %v871
        %936 = vst [vmem:[%s224 + $0x88] sm:$0xff] %v872
        %937 = vst [vmem:[%s224 + $0x90] sm:$0xff] %v873
        %938 = vst [vmem:[%s224 + $0x98] sm:$0xff] %v874
        %939 = vst [vmem:[%s224 + $0xa0] sm:$0xff] %v875
        %940 = vst [vmem:[%s224 + $0xa8] sm:$0xff] %v876
        %941 = vst [vmem:[%s224 + $0xb0] sm:$0xff] %v877
        %942 = vst [vmem:[%s224 + $0xb8] sm:$0xff] %v878
        %943 = vst [vmem:[%s224 + $0xc0] sm:$0xff] %v879
        %944 = vst [vmem:[%s224 + $0xc8] sm:$0xff] %v880
        %945 = vst [vmem:[%s224 + $0xd0] sm:$0xff] %v881
        %946 = vst [vmem:[%s224 + $0xd8] sm:$0xff] %v882
        %947 = vst [vmem:[%s224 + $0xe0] sm:$0xff] %v883
        %948 = vst [vmem:[%s224 + $0xe8] sm:$0xff] %v884
        %949 = vst [vmem:[%s224 + $0xf0] sm:$0xff] %v885
        %950 = vst [vmem:[%s224 + $0xf8] sm:$0xff] %v886
        %951 = vst [vmem:[%s224 + $0x100] sm:$0xff] %v887
        %952 = vst [vmem:[%s224 + $0x108] sm:$0xff] %v888
        %953 = vst [vmem:[%s224 + $0x110] sm:$0xff] %v889
        %954 = vst [vmem:[%s224 + $0x118] sm:$0xff] %v890
        %955 = vst [vmem:[%s224 + $0x120] sm:$0xff] %v891
        %956 = vst [vmem:[%s224 + $0x128] sm:$0xff] %v892
        %957 = vst [vmem:[%s224 + $0x130] sm:$0xff] %v893
        %958 = vst [vmem:[%s224 + $0x138] sm:$0xff] %v894
        %959 = vst [vmem:[%s224 + $0x140] sm:$0xff] %v895
        %960 = vst [vmem:[%s224 + $0x148] sm:$0xff] %v896
        %961 = vst [vmem:[%s224 + $0x150] sm:$0xff] %v897
        %962 = vst [vmem:[%s224 + $0x158] sm:$0xff] %v898
        %963 = vst [vmem:[%s224 + $0x160] sm:$0xff] %v899
        %964 = vst [vmem:[%s224 + $0x168] sm:$0xff] %v900
        %965 = vst [vmem:[%s224 + $0x170] sm:$0xff] %v901
        %966 = vst [vmem:[%s224 + $0x178] sm:$0xff] %v902
        %967 = vst [vmem:[%s224 + $0x180] sm:$0xff] %v903
        %968 = vst [vmem:[%s224 + $0x188] sm:$0xff] %v904
        %969 = vst [vmem:[%s224 + $0x190] sm:$0xff] %v905
        %970 = vst [vmem:[%s224 + $0x198] sm:$0xff] %v906
        %971 = vst [vmem:[%s224 + $0x1a0] sm:$0xff] %v907
        %972 = vst [vmem:[%s224 + $0x1a8] sm:$0xff] %v908
        %973 = vst [vmem:[%s224 + $0x1b0] sm:$0xff] %v909
        %974 = vst [vmem:[%s224 + $0x1b8] sm:$0xff] %v910
        %975 = vst [vmem:[%s224 + $0x1c0] sm:$0xff] %v911
        %976 = vst [vmem:[%s224 + $0x1c8] sm:$0xff] %v912
        %977 = vst [vmem:[%s224 + $0x1d0] sm:$0xff] %v913
        %978 = vst [vmem:[%s224 + $0x1d8] sm:$0xff] %v914
        %979 = vst [vmem:[%s224 + $0x1e0] sm:$0xff] %v915
        %980 = vst [vmem:[%s224 + $0x1e8] sm:$0xff] %v916
        %981 = vst [vmem:[%s224 + $0x1f0] sm:$0xff] %v917
        %982 = vst [vmem:[%s224 + $0x1f8] sm:$0xff] %v918
        %s983 = sand.u32 %s104, 1
        %s984 = scalar_lea.sflag [#allocation4], %s983
        %s985 = sand.u32 %s104, 1
        %s986 = smul.addr %s985, 512
        %s987 = scalar_lea.vmem [#allocation7], %s986
        // Predicated region
        $region41: #{tpu_custom_call.1} parent=31 // pred_check
          %p988 = pneg %p114
        $region42: #{tpu_custom_call.1} parent=31 // pred_check_branch
          %990 = sbr.rel (%p988) target = $region44
        $region43: #{tpu_custom_call.1} parent=31 // pred_region
          %s991 = smul.u32 16, %s23
          %s993 = ssub.s32 8192, 8192
          %994 = vsyncadd %s984, %s993
          %s995 = smul.addr %s991, 128
          %s996 = scalar_lea.hbm %s3, %s995
          %s997 = sshll.u32 %s987, 4
          %s998 = int_to_ptr.vmem [resolvable:$true] %s997
          %1003 = dma.vmem_to_hbm [thread:$0]  %s998, 8192, %s996, %s984, 2048, 16384, 128
        $region44: #{tpu_custom_call.1} parent=31 // pred_fallthru
          _
      $region32: #{tpu_custom_call.1} parent=5 // pred_fallthru
        _
      %p1004 = scmp.le.s32.totalorder 2, %s18
      // Predicated region
      $region45: #{tpu_custom_call.1} parent=5 // pred_check
        %p1005 = pneg %p1004
      $region46: #{tpu_custom_call.1} parent=5 // pred_check_branch
        %1007 = sbr.rel (%p1005) target = $region48
      $region47: #{tpu_custom_call.1} parent=5 // pred_region
        %s1008 = ssub.s32 %s18, 2
        // Predicated region
        $region49: #{tpu_custom_call.1} parent=47 // pred_check
          %p1009 = pneg %p120
        $region50: #{tpu_custom_call.1} parent=47 // pred_check_branch
          %1011 = sbr.rel (%p1009) target = $region52
        $region51: #{tpu_custom_call.1} parent=47 // pred_region
          %s1012 = sand.u32 %s105, 1
          %s1013 = scalar_lea.sflag [#allocation4], %s1012
          %s1014 = sand.u32 %s105, 1
          %s1015 = smul.addr %s1014, 512
          %s1016 = scalar_lea.vmem [#allocation7], %s1015
          %1017 = dma.done %s1013, 8192
        $region52: #{tpu_custom_call.1} parent=47 // pred_fallthru
          _
      $region48: #{tpu_custom_call.1} parent=5 // pred_fallthru
        _
    $region6: #{tpu_custom_call.1} parent=1 // loop_footer
      %s22 = sadd.s32 1, %s18
    $region7: #{tpu_custom_call.1} parent=1 // loop_footer_branch
      %17 = sbr.rel target = $region3
    $region8: #{tpu_custom_call.1} parent=1 // loop_exit
      _
    %1018 = vsyncpa [#allocation3], 1
    %s1019 = scalar_lea.sflag [#allocation3], 1
    %1020 = vsyncpa %s1019, 1
    %1021 = vsyncpa [#allocation6], 1
    %s1022 = scalar_lea.sflag [#allocation6], 1
    %1023 = vsyncpa %s1022, 1
    %1024 = vsyncpa [#allocation4], 1
    %s1025 = scalar_lea.sflag [#allocation4], 1
    %1026 = vsyncpa %s1025, 1

</llo_original>
